<compile_context>
chip_gen: v7x
topology: tpu7x:2x2x1
jax: 0.10.0
libtpu: 0.0.40
codegen_flags: <defaults>
</compile_context>

<pallas_src>
import functools

import jax
import jax.numpy as jnp
from jax import lax
from jax.experimental import pallas as pl
from jax.experimental.pallas import tpu as pltpu

LANE = 128     # vreg lane width
SUBLANE = 8    # f32 sublane count


def _round_up(x, m):
    return (x + m - 1) // m * m


# ---------------------------------------------------------------------------
# Fused Pallas kernel: the entire Cheb forward (n_layers shared ChebConv + final)
# ---------------------------------------------------------------------------
def cheb_fused_kernel(ahat_ref, x0_ref, w0l_ref, w1l_ref, bl_ref,
                      w0f_ref, w1f_ref, bf_ref, o_ref, *, n_layers):
    ahat = ahat_ref[...]                       # (Np, Np)   bf16
    w0l = w0l_ref[...]                         # (Fp, Fp)   bf16
    w1l = w1l_ref[...]                         # (Fp, Fp)   bf16
    bl = bl_ref[...]                           # (1, Fp)    f32
    w0f = w0f_ref[...]                         # (Fp, Fop)  bf16
    w1f = w1f_ref[...]                         # (Fp, Fop)  bf16
    bf = bf_ref[...]                           # (1, Fop)   f32

    def cheb_layer(h_f32, w0, w1, bias, relu):
        h_bf = h_f32.astype(jnp.bfloat16)      # single cast, reused by both dots
        # Chebyshev basis (k=2, lambda_max=2.0): X0 = X, X1 = -Ahat @ X
        ax = jnp.dot(ahat, h_bf, preferred_element_type=jnp.float32)       # (Np, F)
        out = (jnp.dot(h_bf, w0, preferred_element_type=jnp.float32)
               - jnp.dot(ax.astype(jnp.bfloat16), w1,
                         preferred_element_type=jnp.float32)
               + bias)                                                      # f32 VPU
        if relu:
            out = jnp.maximum(out, 0.0)
        return out

    h = cheb_layer(x0_ref[...], w0l, w1l, bl, True)     # first shared layer
    for _ in range(n_layers - 1):                       # statically unrolled
        h = cheb_layer(h, w0l, w1l, bl, True)
    o_ref[...] = cheb_layer(h, w0f, w1f, bf, False)     # final layer (no ReLU)


# ---------------------------------------------------------------------------
# Parameters (deterministic synthetic weights, ChebConv(k=2) ~ Linear(2*Fin, Fout)),
# pre-padded into lane-dense slabs.
# ---------------------------------------------------------------------------
def init_params(key, in_feats, h_feats, out_feats):
    n_pad = _round_up(in_feats, SUBLANE)
    f_pad = _round_up(h_feats, LANE)
    fo_pad = _round_up(out_feats, LANE)

    k0, k1, k2, k3 = jax.random.split(key, 4)

    def lin(kw, kb, fin, fout, fin_pad, fout_pad):
        bound = 1.0 / jnp.sqrt(2.0 * fin)                 # fan_in = k * in_feats
        w = jax.random.uniform(kw, (2 * fin, fout), jnp.float32, -bound, bound)
        b = jax.random.uniform(kb, (1, fout), jnp.float32, -bound, bound)
        w0 = jnp.zeros((fin_pad, fout_pad), jnp.float32).at[:fin, :fout].set(w[:fin])
        w1 = jnp.zeros((fin_pad, fout_pad), jnp.float32).at[:fin, :fout].set(w[fin:])
        b_pad = jnp.zeros((1, fout_pad), jnp.float32).at[:, :fout].set(b)
        return w0.astype(jnp.bfloat16), w1.astype(jnp.bfloat16), b_pad

    w0l, w1l, bl = lin(k0, k1, h_feats, h_feats, f_pad, f_pad)       # self.layer
    w0f, w1f, bf = lin(k2, k3, h_feats, out_feats, f_pad, fo_pad)    # self.final_layer

    # node_feat(): one-hot eye(in_feats, h_feats), zero-padded lane-dense
    x0 = jnp.zeros((n_pad, f_pad), jnp.float32)
    x0 = x0.at[:in_feats, :h_feats].set(jnp.eye(in_feats, h_feats, dtype=jnp.float32))
    return dict(w0l=w0l, w1l=w1l, bl=bl, w0f=w0f, w1f=w1f, bf=bf, x0=x0)


# ---------------------------------------------------------------------------
# Jitted forward: degree normalization (once) + single fused pallas_call + slice
# ---------------------------------------------------------------------------
@functools.partial(jax.jit, static_argnames=("n_layers", "out_feats"))
def cheb_forward(adj, params, *, n_layers, out_feats):
    n = adj.shape[0]
    x0 = params["x0"]
    n_pad, f_pad = x0.shape
    fo_pad = params["bf"].shape[1]

    # Zero-pad adjacency; padded rows/cols stay zero so they never mix with real nodes.
    adj_pad = jnp.zeros((n_pad, n_pad), jnp.float32).at[:n, :n].set(adj)
    # Symmetric degree normalization: Ahat = D^-1/2 A D^-1/2 (clamp deg>=1 keeps dinv finite)
    deg = jnp.maximum(jnp.sum(adj_pad, axis=0), 1.0)
    dinv = lax.rsqrt(deg)
    ahat = (adj_pad * dinv[:, None] * dinv[None, :]).astype(jnp.bfloat16)
    # NOTE: lambda_max fixed at 2.0 (DGL fallback) -> rescaled Laplacian L~ = -Ahat.
    # TODO(synk): exact DGL laplacian_lambda_max (sparse eigensolve) has no Pallas equivalent.

    kernel = functools.partial(cheb_fused_kernel, n_layers=n_layers)
    out_pad = pl.pallas_call(
        kernel,
        out_shape=jax.ShapeDtypeStruct((n_pad, fo_pad), jnp.float32),
        # tiny problem -> single full-array (lane-dense) block per operand, no grid
        # TODO(synk): for large N, tile Ahat with grid=(N//tm, N//tk) ('parallel','arbitrary')
        # and a (tm, Fp) f32 accumulator sized to v7x's 64 MiB VMEM.
        in_specs=[
            pl.BlockSpec((n_pad, n_pad), lambda: (0, 0)),
            pl.BlockSpec((n_pad, f_pad), lambda: (0, 0)),
            pl.BlockSpec((f_pad, f_pad), lambda: (0, 0)),
            pl.BlockSpec((f_pad, f_pad), lambda: (0, 0)),
            pl.BlockSpec((1, f_pad), lambda: (0, 0)),
            pl.BlockSpec((f_pad, fo_pad), lambda: (0, 0)),
            pl.BlockSpec((f_pad, fo_pad), lambda: (0, 0)),
            pl.BlockSpec((1, fo_pad), lambda: (0, 0)),
        ],
        out_specs=pl.BlockSpec((n_pad, fo_pad), lambda: (0, 0)),
        compiler_params=pltpu.CompilerParams(vmem_limit_bytes=32 * 1024 * 1024),
    )(ahat, x0, params["w0l"], params["w1l"], params["bl"],
      params["w0f"], params["w1f"], params["bf"])

    return out_pad[:n, :out_feats]


# ---------------------------------------------------------------------------
# Pure-JAX reference (same padded bf16-rounded operands) for correctness check
# ---------------------------------------------------------------------------
def cheb_reference(adj, params, n_layers, out_feats):
    n = adj.shape[0]
    x0 = params["x0"]
    n_pad, _ = x0.shape

    adj_pad = jnp.zeros((n_pad, n_pad), jnp.float32).at[:n, :n].set(adj)
    deg = jnp.maximum(jnp.sum(adj_pad, axis=0), 1.0)
    dinv = deg ** -0.5
    ahat = (adj_pad * dinv[:, None] * dinv[None, :]).astype(jnp.bfloat16).astype(jnp.float32)

    w0l = params["w0l"].astype(jnp.float32)
    w1l = params["w1l"].astype(jnp.float32)
    w0f = params["w0f"].astype(jnp.float32)
    w1f = params["w1f"].astype(jnp.float32)
    bl, bf = params["bl"], params["bf"]

    def layer(h, w0, w1, b, relu):
        h_bf = h.astype(jnp.bfloat16).astype(jnp.float32)
        ax = ahat @ h_bf
        o = h_bf @ w0 - ax.astype(jnp.bfloat16).astype(jnp.float32) @ w1 + b
        return jnp.maximum(o, 0.0) if relu else o

    h = layer(x0, w0l, w1l, bl, True)
    for _ in range(n_layers - 1):
        h = layer(h, w0l, w1l, bl, True)
    out = layer(h, w0f, w1f, bf, False)
    return out[:n, :out_feats]


if __name__ == "__main__":
    # Small deterministic example: 16 nodes (in_feats), hidden 32, out 8, 2 layers.
    IN_FEATS, H_FEATS, OUT_FEATS, N_LAYERS = 16, 32, 8, 2

    key = jax.random.PRNGKey(0)
    k_adj, k_params = jax.random.split(key)

    # Random undirected graph (symmetric 0/1 adjacency, no self loops).
    upper = (jax.random.uniform(k_adj, (IN_FEATS, IN_FEATS)) < 0.3).astype(jnp.float32)
    upper = jnp.triu(upper, k=1)
    adj = upper + upper.T

    params = init_params(k_params, IN_FEATS, H_FEATS, OUT_FEATS)

    out = cheb_forward(adj, params, n_layers=N_LAYERS, out_feats=OUT_FEATS)  # (16, 8)
    jax.block_until_ready(out)

    ref = cheb_reference(adj, params, N_LAYERS, OUT_FEATS)

    assert out.shape == (IN_FEATS, OUT_FEATS)
    assert out.dtype == jnp.float32
    assert jnp.allclose(out, ref, atol=1e-3, rtol=1e-3)
    print("KERNEL_OK")
</pallas_src>

<mosaic_0001>
module attributes {stable_mosaic.version = 11 : i64} {
  func.func @cheb_fused_kernel(%arg0: memref<16x16xbf16, #tpu.memory_space<vmem>>, %arg1: memref<16x128xf32, #tpu.memory_space<vmem>>, %arg2: memref<128x128xbf16, #tpu.memory_space<vmem>>, %arg3: memref<128x128xbf16, #tpu.memory_space<vmem>>, %arg4: memref<1x128xf32, #tpu.memory_space<vmem>>, %arg5: memref<128x128xbf16, #tpu.memory_space<vmem>>, %arg6: memref<128x128xbf16, #tpu.memory_space<vmem>>, %arg7: memref<1x128xf32, #tpu.memory_space<vmem>>, %arg8: memref<16x128xf32, #tpu.memory_space<vmem>>) attributes {dimension_semantics = [], scalar_prefetch = 0 : i64, scratch_operands = 0 : i64, tpu.core_type = #tpu.core_type<tc>} {
    %c0 = arith.constant 0 : index
    %c0_0 = arith.constant 0 : index
    %0 = vector.load %arg0[%c0, %c0_0] : memref<16x16xbf16, #tpu.memory_space<vmem>>, vector<16x16xbf16>
    %c0_1 = arith.constant 0 : index
    %c0_2 = arith.constant 0 : index
    %1 = vector.load %arg2[%c0_1, %c0_2] : memref<128x128xbf16, #tpu.memory_space<vmem>>, vector<128x128xbf16>
    %c0_3 = arith.constant 0 : index
    %c0_4 = arith.constant 0 : index
    %2 = vector.load %arg3[%c0_3, %c0_4] : memref<128x128xbf16, #tpu.memory_space<vmem>>, vector<128x128xbf16>
    %c0_5 = arith.constant 0 : index
    %c0_6 = arith.constant 0 : index
    %3 = vector.load %arg4[%c0_5, %c0_6] : memref<1x128xf32, #tpu.memory_space<vmem>>, vector<1x128xf32>
    %c0_7 = arith.constant 0 : index
    %c0_8 = arith.constant 0 : index
    %4 = vector.load %arg5[%c0_7, %c0_8] : memref<128x128xbf16, #tpu.memory_space<vmem>>, vector<128x128xbf16>
    %c0_9 = arith.constant 0 : index
    %c0_10 = arith.constant 0 : index
    %5 = vector.load %arg6[%c0_9, %c0_10] : memref<128x128xbf16, #tpu.memory_space<vmem>>, vector<128x128xbf16>
    %c0_11 = arith.constant 0 : index
    %c0_12 = arith.constant 0 : index
    %6 = vector.load %arg7[%c0_11, %c0_12] : memref<1x128xf32, #tpu.memory_space<vmem>>, vector<1x128xf32>
    %c0_13 = arith.constant 0 : index
    %c0_14 = arith.constant 0 : index
    %7 = vector.load %arg1[%c0_13, %c0_14] : memref<16x128xf32, #tpu.memory_space<vmem>>, vector<16x128xf32>
    %8 = arith.truncf %7 : vector<16x128xf32> to vector<16x128xbf16>
    %cst = arith.constant dense<0.000000e+00> : vector<16x128xf32>
    %9 = tpu.matmul %0, %8, %cst {dimension_numbers = #tpu.dot_dimension_numbers<[1], [0], [0], [1], [0, 0, 1, 1], [], []>} : vector<16x16xbf16>, vector<16x128xbf16>, vector<16x128xf32> -> vector<16x128xf32>
    %cst_15 = arith.constant dense<0.000000e+00> : vector<16x128xf32>
    %10 = tpu.matmul %8, %1, %cst_15 {dimension_numbers = #tpu.dot_dimension_numbers<[1], [0], [0], [1], [0, 0, 1, 1], [], []>} : vector<16x128xbf16>, vector<128x128xbf16>, vector<16x128xf32> -> vector<16x128xf32>
    %11 = arith.truncf %9 : vector<16x128xf32> to vector<16x128xbf16>
    %cst_16 = arith.constant dense<0.000000e+00> : vector<16x128xf32>
    %12 = tpu.matmul %11, %2, %cst_16 {dimension_numbers = #tpu.dot_dimension_numbers<[1], [0], [0], [1], [0, 0, 1, 1], [], []>} : vector<16x128xbf16>, vector<128x128xbf16>, vector<16x128xf32> -> vector<16x128xf32>
    %13 = arith.subf %10, %12 : vector<16x128xf32>
    %14 = vector.broadcast %3 : vector<1x128xf32> to vector<16x128xf32>
    %15 = arith.addf %13, %14 : vector<16x128xf32>
    %cst_17 = arith.constant 0.000000e+00 : f32
    %16 = vector.broadcast %cst_17 : f32 to vector<16x128xf32>
    %17 = arith.maximumf %15, %16 : vector<16x128xf32>
    %18 = arith.truncf %17 : vector<16x128xf32> to vector<16x128xbf16>
    %cst_18 = arith.constant dense<0.000000e+00> : vector<16x128xf32>
    %19 = tpu.matmul %0, %18, %cst_18 {dimension_numbers = #tpu.dot_dimension_numbers<[1], [0], [0], [1], [0, 0, 1, 1], [], []>} : vector<16x16xbf16>, vector<16x128xbf16>, vector<16x128xf32> -> vector<16x128xf32>
    %cst_19 = arith.constant dense<0.000000e+00> : vector<16x128xf32>
    %20 = tpu.matmul %18, %1, %cst_19 {dimension_numbers = #tpu.dot_dimension_numbers<[1], [0], [0], [1], [0, 0, 1, 1], [], []>} : vector<16x128xbf16>, vector<128x128xbf16>, vector<16x128xf32> -> vector<16x128xf32>
    %21 = arith.truncf %19 : vector<16x128xf32> to vector<16x128xbf16>
    %cst_20 = arith.constant dense<0.000000e+00> : vector<16x128xf32>
    %22 = tpu.matmul %21, %2, %cst_20 {dimension_numbers = #tpu.dot_dimension_numbers<[1], [0], [0], [1], [0, 0, 1, 1], [], []>} : vector<16x128xbf16>, vector<128x128xbf16>, vector<16x128xf32> -> vector<16x128xf32>
    %23 = arith.subf %20, %22 : vector<16x128xf32>
    %24 = vector.broadcast %3 : vector<1x128xf32> to vector<16x128xf32>
    %25 = arith.addf %23, %24 : vector<16x128xf32>
    %cst_21 = arith.constant 0.000000e+00 : f32
    %26 = vector.broadcast %cst_21 : f32 to vector<16x128xf32>
    %27 = arith.maximumf %25, %26 : vector<16x128xf32>
    %28 = arith.truncf %27 : vector<16x128xf32> to vector<16x128xbf16>
    %cst_22 = arith.constant dense<0.000000e+00> : vector<16x128xf32>
    %29 = tpu.matmul %0, %28, %cst_22 {dimension_numbers = #tpu.dot_dimension_numbers<[1], [0], [0], [1], [0, 0, 1, 1], [], []>} : vector<16x16xbf16>, vector<16x128xbf16>, vector<16x128xf32> -> vector<16x128xf32>
    %cst_23 = arith.constant dense<0.000000e+00> : vector<16x128xf32>
    %30 = tpu.matmul %28, %4, %cst_23 {dimension_numbers = #tpu.dot_dimension_numbers<[1], [0], [0], [1], [0, 0, 1, 1], [], []>} : vector<16x128xbf16>, vector<128x128xbf16>, vector<16x128xf32> -> vector<16x128xf32>
    %31 = arith.truncf %29 : vector<16x128xf32> to vector<16x128xbf16>
    %cst_24 = arith.constant dense<0.000000e+00> : vector<16x128xf32>
    %32 = tpu.matmul %31, %5, %cst_24 {dimension_numbers = #tpu.dot_dimension_numbers<[1], [0], [0], [1], [0, 0, 1, 1], [], []>} : vector<16x128xbf16>, vector<128x128xbf16>, vector<16x128xf32> -> vector<16x128xf32>
    %33 = arith.subf %30, %32 : vector<16x128xf32>
    %34 = vector.broadcast %6 : vector<1x128xf32> to vector<16x128xf32>
    %35 = arith.addf %33, %34 : vector<16x128xf32>
    %c0_25 = arith.constant 0 : index
    %c0_26 = arith.constant 0 : index
    %36 = vector.load %arg8[%c0_25, %c0_26] : memref<16x128xf32, #tpu.memory_space<vmem>>, vector<16x128xf32>
    tpu.vector_store %arg8[%c0_25, %c0_26], %35 {strides = array<i32>} : memref<16x128xf32, #tpu.memory_space<vmem>>, vector<16x128xf32>,
    return
  }
}

</mosaic_0001>

<llo_original>
// kernel: cheb_forward.1
$region0: #{cheb_forward.1}
  #allocation0 [shape = 'u32[]', space=smem, size = 0x4, offset = 0x4, fixed_abs, tag = 'smem constant byte address 0x4 - core index']
  #allocation1 [shape = 'u32[144,128]{1,0:T(1,128)}', space=vmem, size = 0x12000, scoped, tag = 'internal scratch']
  %s0 = inlined_call_operand.vmem [shape: bf16[16,16], index: 0, kind: input, shape index: {}]
  %s1 = inlined_call_operand.hbm [shape: f32[16,128], index: 1, kind: input, shape index: {}]
  %s2 = inlined_call_operand.hbm [shape: bf16[128,128], index: 2, kind: input, shape index: {}]
  %s3 = inlined_call_operand.vmem [shape: bf16[128,128], index: 3, kind: input, shape index: {}]
  %s4 = inlined_call_operand.vmem [shape: f32[1,128], index: 4, kind: input, shape index: {}]
  %s5 = inlined_call_operand.hbm [shape: bf16[128,128], index: 5, kind: input, shape index: {}]
  %s6 = inlined_call_operand.hbm [shape: bf16[128,128], index: 6, kind: input, shape index: {}]
  %s7 = inlined_call_operand.vmem [shape: f32[1,128], index: 7, kind: input, shape index: {}]
  %s8 = inlined_call_operand.vmem [shape: f32[16,128], index: 8, kind: output, shape index: {}]
  %s9 = sld [smem:[#allocation0]]
  $region58: #{cheb_forward.1} parent=0
    _
  %s11 = ssub.s32 1, %s9
  %s12 = scalar_select 0, %s11, %s9
  $region1: #{cheb_forward.1} parent=0
    #allocation2 [shape = 'u8[8192]{0}', space=vmem, size = 0x2000, scoped, tag = 'input window, operand 1, single buffered']
    #allocation3 [shape = 's32[1]{0}', space=sflag, size = 0x4, scoped, tag = 'scoped memory for cheb_forward.1']
    #allocation4 [shape = 'u8[32768]{0}', space=vmem, size = 0x8000, scoped, tag = 'input window, operand 2, single buffered']
    #allocation5 [shape = 's32[1]{0}', space=sflag, size = 0x4, scoped, tag = 'scoped memory for cheb_forward.1']
    #allocation6 [shape = 'u8[32768]{0}', space=vmem, size = 0x8000, scoped, tag = 'input window, operand 5, single buffered']
    #allocation7 [shape = 'u8[32768]{0}', space=vmem, size = 0x8000, scoped, tag = 'input window, operand 6, single buffered']
    #allocation8 [shape = 's32[1]{0}', space=sflag, size = 0x4, scoped, tag = 'scoped memory for cheb_forward.1']
    %13 = vsyncpa [#allocation3], 0
    %14 = vsyncpa [#allocation5], 0
    %15 = vsyncpa [#allocation8], 0
    // Predicated region
    $region2: #{cheb_forward.1} parent=1 // pred_check
      _
    $region3: #{cheb_forward.1} parent=1 // pred_check_branch
      %17 = sbr.rel (0) target = $region5
    $region4: #{cheb_forward.1} parent=1 // pred_region
      _
    $region5: #{cheb_forward.1} parent=1 // pred_fallthru
      _
    // Predicated region
    $region6: #{cheb_forward.1} parent=1 // pred_check
      _
    $region7: #{cheb_forward.1} parent=1 // pred_check_branch
      %19 = sbr.rel (0) target = $region9
    $region8: #{cheb_forward.1} parent=1 // pred_region
      %s21 = ssub.s32 256, 256
      %22 = vsyncadd [#allocation3], %s21
      %s23 = sshll.u32 [#allocation2], 4
      %s24 = int_to_ptr.vmem [resolvable:$true] %s23
      %29 = dma.hbm_to_vmem [thread:$0]  %s1, 256, %s24, [#allocation3], 128, 128, 8
    $region9: #{cheb_forward.1} parent=1 // pred_fallthru
      _
    // Predicated region
    $region10: #{cheb_forward.1} parent=1 // pred_check
      _
    $region11: #{cheb_forward.1} parent=1 // pred_check_branch
      %31 = sbr.rel (0) target = $region13
    $region12: #{cheb_forward.1} parent=1 // pred_region
      %s33 = ssub.s32 1024, 1024
      %34 = vsyncadd [#allocation5], %s33
      %s35 = sshll.u32 [#allocation4], 4
      %s36 = int_to_ptr.vmem [resolvable:$true] %s35
      %41 = dma.hbm_to_vmem [thread:$0]  %s2, 1024, %s36, [#allocation5], 64, 64, 4
    $region13: #{cheb_forward.1} parent=1 // pred_fallthru
      _
    // Predicated region
    $region14: #{cheb_forward.1} parent=1 // pred_check
      _
    $region15: #{cheb_forward.1} parent=1 // pred_check_branch
      %43 = sbr.rel (0) target = $region17
    $region16: #{cheb_forward.1} parent=1 // pred_region
      _
    $region17: #{cheb_forward.1} parent=1 // pred_fallthru
      _
    // Predicated region
    $region18: #{cheb_forward.1} parent=1 // pred_check
      _
    $region19: #{cheb_forward.1} parent=1 // pred_check_branch
      %45 = sbr.rel (0) target = $region21
    $region20: #{cheb_forward.1} parent=1 // pred_region
      _
    $region21: #{cheb_forward.1} parent=1 // pred_fallthru
      _
    // Predicated region
    $region22: #{cheb_forward.1} parent=1 // pred_check
      _
    $region23: #{cheb_forward.1} parent=1 // pred_check_branch
      %47 = sbr.rel (0) target = $region25
    $region24: #{cheb_forward.1} parent=1 // pred_region
      %s49 = ssub.s32 1024, 1024
      %50 = vsyncadd [#allocation5], %s49
      %s51 = sshll.u32 [#allocation6], 4
      %s52 = int_to_ptr.vmem [resolvable:$true] %s51
      %57 = dma.hbm_to_vmem [thread:$0]  %s5, 1024, %s52, [#allocation5], 64, 64, 4
    $region25: #{cheb_forward.1} parent=1 // pred_fallthru
      _
    // Predicated region
    $region26: #{cheb_forward.1} parent=1 // pred_check
      _
    $region27: #{cheb_forward.1} parent=1 // pred_check_branch
      %59 = sbr.rel (0) target = $region29
    $region28: #{cheb_forward.1} parent=1 // pred_region
      %s61 = ssub.s32 1024, 1024
      %62 = vsyncadd [#allocation8], %s61
      %s63 = sshll.u32 [#allocation7], 4
      %s64 = int_to_ptr.vmem [resolvable:$true] %s63
      %69 = dma.hbm_to_vmem [thread:$0]  %s6, 1024, %s64, [#allocation8], 64, 64, 4
    $region29: #{cheb_forward.1} parent=1 // pred_fallthru
      _
    // Predicated region
    $region30: #{cheb_forward.1} parent=1 // pred_check
      _
    $region31: #{cheb_forward.1} parent=1 // pred_check_branch
      %71 = sbr.rel (0) target = $region33
    $region32: #{cheb_forward.1} parent=1 // pred_region
      _
    $region33: #{cheb_forward.1} parent=1 // pred_fallthru
      _
    // Predicated region
    $region34: #{cheb_forward.1} parent=1 // pred_check
      _
    $region35: #{cheb_forward.1} parent=1 // pred_check_branch
      %73 = sbr.rel (0) target = $region37
    $region36: #{cheb_forward.1} parent=1 // pred_region
      %74 = dma.done [#allocation3], 256
    $region37: #{cheb_forward.1} parent=1 // pred_fallthru
      _
    // Predicated region
    $region38: #{cheb_forward.1} parent=1 // pred_check
      _
    $region39: #{cheb_forward.1} parent=1 // pred_check_branch
      %76 = sbr.rel (0) target = $region41
    $region40: #{cheb_forward.1} parent=1 // pred_region
      %77 = dma.done [#allocation5], 1024
    $region41: #{cheb_forward.1} parent=1 // pred_fallthru
      _
    // Predicated region
    $region42: #{cheb_forward.1} parent=1 // pred_check
      _
    $region43: #{cheb_forward.1} parent=1 // pred_check_branch
      %79 = sbr.rel (0) target = $region45
    $region44: #{cheb_forward.1} parent=1 // pred_region
      %80 = dma.done [#allocation5], 1024
    $region45: #{cheb_forward.1} parent=1 // pred_fallthru
      _
    // Predicated region
    $region46: #{cheb_forward.1} parent=1 // pred_check
      _
    $region47: #{cheb_forward.1} parent=1 // pred_check_branch
      %82 = sbr.rel (0) target = $region49
    $region48: #{cheb_forward.1} parent=1 // pred_region
      %83 = dma.done [#allocation8], 1024
    $region49: #{cheb_forward.1} parent=1 // pred_fallthru
      _
    %v85 = vld [vmem:[%s0] sm:$0xf]
    %v86 = vld [vmem:[%s0 + $0x4] sm:$0xf]
    %v87 = vld [vmem:[#allocation4] sm:$0xf]
    %v88 = vld [vmem:[#allocation4 + $0x4] sm:$0xf]
    %v89 = vld [vmem:[#allocation4 + $0x8] sm:$0xf]
    %v90 = vld [vmem:[#allocation4 + $0xc] sm:$0xf]
    %v91 = vld [vmem:[#allocation4 + $0x10] sm:$0xf]
    %v92 = vld [vmem:[#allocation4 + $0x14] sm:$0xf]
    %v93 = vld [vmem:[#allocation4 + $0x18] sm:$0xf]
    %v94 = vld [vmem:[#allocation4 + $0x1c] sm:$0xf]
    %v95 = vld [vmem:[#allocation4 + $0x20] sm:$0xf]
    %v96 = vld [vmem:[#allocation4 + $0x24] sm:$0xf]
    %v97 = vld [vmem:[#allocation4 + $0x28] sm:$0xf]
    %v98 = vld [vmem:[#allocation4 + $0x2c] sm:$0xf]
    %v99 = vld [vmem:[#allocation4 + $0x30] sm:$0xf]
    %v100 = vld [vmem:[#allocation4 + $0x34] sm:$0xf]
    %v101 = vld [vmem:[#allocation4 + $0x38] sm:$0xf]
    %v102 = vld [vmem:[#allocation4 + $0x3c] sm:$0xf]
    %v103 = vld [vmem:[%s3] sm:$0xf]
    %v104 = vld [vmem:[%s3 + $0x4] sm:$0xf]
    %v105 = vld [vmem:[%s3 + $0x8] sm:$0xf]
    %v106 = vld [vmem:[%s3 + $0xc] sm:$0xf]
    %v107 = vld [vmem:[%s3 + $0x10] sm:$0xf]
    %v108 = vld [vmem:[%s3 + $0x14] sm:$0xf]
    %v109 = vld [vmem:[%s3 + $0x18] sm:$0xf]
    %v110 = vld [vmem:[%s3 + $0x1c] sm:$0xf]
    %v111 = vld [vmem:[%s3 + $0x20] sm:$0xf]
    %v112 = vld [vmem:[%s3 + $0x24] sm:$0xf]
    %v113 = vld [vmem:[%s3 + $0x28] sm:$0xf]
    %v114 = vld [vmem:[%s3 + $0x2c] sm:$0xf]
    %v115 = vld [vmem:[%s3 + $0x30] sm:$0xf]
    %v116 = vld [vmem:[%s3 + $0x34] sm:$0xf]
    %v117 = vld [vmem:[%s3 + $0x38] sm:$0xf]
    %v118 = vld [vmem:[%s3 + $0x3c] sm:$0xf]
    %v119 = vld [vmem:[%s4] sm:$0x1]
    %v120 = vld [vmem:[#allocation6] sm:$0xf]
    %v121 = vld [vmem:[#allocation6 + $0x4] sm:$0xf]
    %v122 = vld [vmem:[#allocation6 + $0x8] sm:$0xf]
    %v123 = vld [vmem:[#allocation6 + $0xc] sm:$0xf]
    %v124 = vld [vmem:[#allocation6 + $0x10] sm:$0xf]
    %v125 = vld [vmem:[#allocation6 + $0x14] sm:$0xf]
    %v126 = vld [vmem:[#allocation6 + $0x18] sm:$0xf]
    %v127 = vld [vmem:[#allocation6 + $0x1c] sm:$0xf]
    %v128 = vld [vmem:[#allocation6 + $0x20] sm:$0xf]
    %v129 = vld [vmem:[#allocation6 + $0x24] sm:$0xf]
    %v130 = vld [vmem:[#allocation6 + $0x28] sm:$0xf]
    %v131 = vld [vmem:[#allocation6 + $0x2c] sm:$0xf]
    %v132 = vld [vmem:[#allocation6 + $0x30] sm:$0xf]
    %v133 = vld [vmem:[#allocation6 + $0x34] sm:$0xf]
    %v134 = vld [vmem:[#allocation6 + $0x38] sm:$0xf]
    %v135 = vld [vmem:[#allocation6 + $0x3c] sm:$0xf]
    %v136 = vld [vmem:[#allocation7] sm:$0xf]
    %v137 = vld [vmem:[#allocation7 + $0x4] sm:$0xf]
    %v138 = vld [vmem:[#allocation7 + $0x8] sm:$0xf]
    %v139 = vld [vmem:[#allocation7 + $0xc] sm:$0xf]
    %v140 = vld [vmem:[#allocation7 + $0x10] sm:$0xf]
    %v141 = vld [vmem:[#allocation7 + $0x14] sm:$0xf]
    %v142 = vld [vmem:[#allocation7 + $0x18] sm:$0xf]
    %v143 = vld [vmem:[#allocation7 + $0x1c] sm:$0xf]
    %v144 = vld [vmem:[#allocation7 + $0x20] sm:$0xf]
    %v145 = vld [vmem:[#allocation7 + $0x24] sm:$0xf]
    %v146 = vld [vmem:[#allocation7 + $0x28] sm:$0xf]
    %v147 = vld [vmem:[#allocation7 + $0x2c] sm:$0xf]
    %v148 = vld [vmem:[#allocation7 + $0x30] sm:$0xf]
    %v149 = vld [vmem:[#allocation7 + $0x34] sm:$0xf]
    %v150 = vld [vmem:[#allocation7 + $0x38] sm:$0xf]
    %v151 = vld [vmem:[#allocation7 + $0x3c] sm:$0xf]
    %v152 = vld [vmem:[%s7] sm:$0x1]
    %v153 = vld [vmem:[#allocation2] sm:$0xff]
    %v154 = vld [vmem:[#allocation2 + $0x8] sm:$0xff]
    %v155 = vpack.c.bf16 %v154, %v153
    %v158 = vunpack.c.l.b16 %v85
    %v159 = vunpack.c.l.b16 %v86
    %v160 = vpack.c.b16 %v159, %v158
    %vm161 = vcmask 130048
    %v163 = vsel %vm161, %v160, 0
    %165 = vmatprep.subr.bf16.mxu0 0
    %166 = vmatpush1.bf16.msra.mxu0 %v155
    %167 = vmatprep.subr.bf16.mxu0 0
    %168 = vmatpush1.bf16.msra.mxu0 0
    %169 = vmatprep.subr.bf16.mxu0 0
    %170 = vmatpush1.bf16.msra.mxu0 0
    %171 = vmatprep.subr.bf16.mxu0 0
    %172 = vmatpush1.bf16.msra.mxu0 0
    %173 = vmatprep.subr.bf16.mxu0 0
    %174 = vmatpush1.bf16.msra.mxu0 0
    %175 = vmatprep.subr.bf16.mxu0 0
    %176 = vmatpush1.bf16.msra.mxu0 0
    %177 = vmatprep.subr.bf16.mxu0 0
    %178 = vmatpush1.bf16.msra.mxu0 0
    %179 = vmatprep.subr.bf16.mxu0 0
    %180 = vmatpush1.bf16.msra.mxu0 0
    %181 = vmatprep.subr.bf16.mxu0 0
    %182 = vmatpush1.bf16.msra.mxu0 0
    %183 = vmatprep.subr.bf16.mxu0 0
    %184 = vmatpush1.bf16.msra.mxu0 0
    %185 = vmatprep.subr.bf16.mxu0 0
    %186 = vmatpush1.bf16.msra.mxu0 0
    %187 = vmatprep.subr.bf16.mxu0 0
    %188 = vmatpush1.bf16.msra.mxu0 0
    %189 = vmatprep.subr.bf16.mxu0 0
    %190 = vmatpush1.bf16.msra.mxu0 0
    %191 = vmatprep.subr.bf16.mxu0 0
    %192 = vmatpush1.bf16.msra.mxu0 0
    %193 = vmatprep.subr.bf16.mxu0 0
    %194 = vmatpush1.bf16.msra.mxu0 0
    %195 = vmatprep.subr.bf16.mxu0 0
    %196 = vmatpush1.bf16.msra.mxu0 0
    %197 = vmatprep.mubr.bf16.mxu0 0
    %198 = vmatmul.mubr.bf16.gmra.mrb[0].mxu0 %v163
    %v199 = vpop.f32.mrb[0].mxu0
    %v200 = vadd.f32 0.0, %v199
    %v201 = vpop.f32.mrb[0].mxu0
    %v202 = vpop.f32.mrb[0].mxu0
    %v203 = vadd.f32 0.0, %v202
    %v204 = vpop.f32.mrb[0].mxu0
    %205 = vdwg.mxu0
    %v222 = vunpack.c.l.b16 %v87
    %v223 = vunpack.c.l.b16 %v88
    %v224 = vunpack.c.l.b16 %v89
    %v225 = vunpack.c.l.b16 %v90
    %v226 = vunpack.c.l.b16 %v91
    %v227 = vunpack.c.l.b16 %v92
    %v228 = vunpack.c.l.b16 %v93
    %v229 = vunpack.c.l.b16 %v94
    %v230 = vunpack.c.l.b16 %v95
    %v231 = vunpack.c.l.b16 %v96
    %v232 = vunpack.c.l.b16 %v97
    %v233 = vunpack.c.l.b16 %v98
    %v234 = vunpack.c.l.b16 %v99
    %v235 = vunpack.c.l.b16 %v100
    %v236 = vunpack.c.l.b16 %v101
    %v237 = vunpack.c.l.b16 %v102
    %v238 = vpack.c.b16 %v223, %v222
    %v239 = vpack.c.b16 %v225, %v224
    %v240 = vpack.c.b16 %v227, %v226
    %v241 = vpack.c.b16 %v229, %v228
    %v242 = vpack.c.b16 %v231, %v230
    %v243 = vpack.c.b16 %v233, %v232
    %v244 = vpack.c.b16 %v235, %v234
    %v245 = vpack.c.b16 %v237, %v236
    %254 = vmatprep.subr.bf16.mxu0 0
    %255 = vmatpush1.bf16.msra.mxu0 %v238
    %256 = vmatprep.subr.bf16.mxu0 0
    %257 = vmatpush1.bf16.msra.mxu0 %v239
    %258 = vmatprep.subr.bf16.mxu0 0
    %259 = vmatpush1.bf16.msra.mxu0 %v240
    %260 = vmatprep.subr.bf16.mxu0 0
    %261 = vmatpush1.bf16.msra.mxu0 %v241
    %262 = vmatprep.subr.bf16.mxu0 0
    %263 = vmatpush1.bf16.msra.mxu0 %v242
    %264 = vmatprep.subr.bf16.mxu0 0
    %265 = vmatpush1.bf16.msra.mxu0 %v243
    %266 = vmatprep.subr.bf16.mxu0 0
    %267 = vmatpush1.bf16.msra.mxu0 %v244
    %268 = vmatprep.subr.bf16.mxu0 0
    %269 = vmatpush1.bf16.msra.mxu0 %v245
    %270 = vmatprep.subr.bf16.mxu0 0
    %271 = vmatpush1.bf16.msra.mxu0 0
    %272 = vmatprep.subr.bf16.mxu0 0
    %273 = vmatpush1.bf16.msra.mxu0 0
    %274 = vmatprep.subr.bf16.mxu0 0
    %275 = vmatpush1.bf16.msra.mxu0 0
    %276 = vmatprep.subr.bf16.mxu0 0
    %277 = vmatpush1.bf16.msra.mxu0 0
    %278 = vmatprep.subr.bf16.mxu0 0
    %279 = vmatpush1.bf16.msra.mxu0 0
    %280 = vmatprep.subr.bf16.mxu0 0
    %281 = vmatpush1.bf16.msra.mxu0 0
    %282 = vmatprep.subr.bf16.mxu0 0
    %283 = vmatpush1.bf16.msra.mxu0 0
    %284 = vmatprep.subr.bf16.mxu0 0
    %285 = vmatpush1.bf16.msra.mxu0 0
    %286 = vmatprep.mubr.bf16.mxu0 0
    %287 = vmatmul.mubr.bf16.gmra.mrb[0].mxu0 %v155
    %v288 = vpop.f32.mrb[0].mxu0
    %v289 = vadd.f32 0.0, %v288
    %v290 = vpop.f32.mrb[0].mxu0
    %v291 = vpop.f32.mrb[0].mxu0
    %v292 = vadd.f32 0.0, %v291
    %v293 = vpop.f32.mrb[0].mxu0
    %294 = vdwg.mxu0
    %v295 = vpack.c.bf16 %v203, %v200
    %v312 = vunpack.c.l.b16 %v103
    %v313 = vunpack.c.l.b16 %v104
    %v314 = vunpack.c.l.b16 %v105
    %v315 = vunpack.c.l.b16 %v106
    %v316 = vunpack.c.l.b16 %v107
    %v317 = vunpack.c.l.b16 %v108
    %v318 = vunpack.c.l.b16 %v109
    %v319 = vunpack.c.l.b16 %v110
    %v320 = vunpack.c.l.b16 %v111
    %v321 = vunpack.c.l.b16 %v112
    %v322 = vunpack.c.l.b16 %v113
    %v323 = vunpack.c.l.b16 %v114
    %v324 = vunpack.c.l.b16 %v115
    %v325 = vunpack.c.l.b16 %v116
    %v326 = vunpack.c.l.b16 %v117
    %v327 = vunpack.c.l.b16 %v118
    %v328 = vpack.c.b16 %v313, %v312
    %v329 = vpack.c.b16 %v315, %v314
    %v330 = vpack.c.b16 %v317, %v316
    %v331 = vpack.c.b16 %v319, %v318
    %v332 = vpack.c.b16 %v321, %v320
    %v333 = vpack.c.b16 %v323, %v322
    %v334 = vpack.c.b16 %v325, %v324
    %v335 = vpack.c.b16 %v327, %v326
    %344 = vmatprep.subr.bf16.mxu0 0
    %345 = vmatpush1.bf16.msra.mxu0 %v328
    %346 = vmatprep.subr.bf16.mxu0 0
    %347 = vmatpush1.bf16.msra.mxu0 %v329
    %348 = vmatprep.subr.bf16.mxu0 0
    %349 = vmatpush1.bf16.msra.mxu0 %v330
    %350 = vmatprep.subr.bf16.mxu0 0
    %351 = vmatpush1.bf16.msra.mxu0 %v331
    %352 = vmatprep.subr.bf16.mxu0 0
    %353 = vmatpush1.bf16.msra.mxu0 %v332
    %354 = vmatprep.subr.bf16.mxu0 0
    %355 = vmatpush1.bf16.msra.mxu0 %v333
    %356 = vmatprep.subr.bf16.mxu0 0
    %357 = vmatpush1.bf16.msra.mxu0 %v334
    %358 = vmatprep.subr.bf16.mxu0 0
    %359 = vmatpush1.bf16.msra.mxu0 %v335
    %360 = vmatprep.subr.bf16.mxu0 0
    %361 = vmatpush1.bf16.msra.mxu0 0
    %362 = vmatprep.subr.bf16.mxu0 0
    %363 = vmatpush1.bf16.msra.mxu0 0
    %364 = vmatprep.subr.bf16.mxu0 0
    %365 = vmatpush1.bf16.msra.mxu0 0
    %366 = vmatprep.subr.bf16.mxu0 0
    %367 = vmatpush1.bf16.msra.mxu0 0
    %368 = vmatprep.subr.bf16.mxu0 0
    %369 = vmatpush1.bf16.msra.mxu0 0
    %370 = vmatprep.subr.bf16.mxu0 0
    %371 = vmatpush1.bf16.msra.mxu0 0
    %372 = vmatprep.subr.bf16.mxu0 0
    %373 = vmatpush1.bf16.msra.mxu0 0
    %374 = vmatprep.subr.bf16.mxu0 0
    %375 = vmatpush1.bf16.msra.mxu0 0
    %376 = vmatprep.mubr.bf16.mxu0 0
    %377 = vmatmul.mubr.bf16.gmra.mrb[0].mxu0 %v295
    %v378 = vpop.f32.mrb[0].mxu0
    %v379 = vadd.f32 0.0, %v378
    %v380 = vpop.f32.mrb[0].mxu0
    %v381 = vpop.f32.mrb[0].mxu0
    %v382 = vadd.f32 0.0, %v381
    %v383 = vpop.f32.mrb[0].mxu0
    %384 = vdwg.mxu0
    %v385 = vsub.f32 %v289, %v379
    %v386 = vsub.f32 %v292, %v382
    %v388 = vlaneseq
    %v389 = vshrl.u32 %v388, 7
    %v390 = vsub.s32 0, %v389
    %v391 = vrot.slane %v119, %v390
    %v393 = vadd.f32 %v385, %v391
    %v394 = vadd.f32 %v386, %v391
    %v395 = vmax.f32 %v393, 0.0
    %v396 = vmax.f32 %v394, 0.0
    %v397 = vpack.c.bf16 %v396, %v395
    %398 = vmatprep.subr.bf16.mxu0 0
    %399 = vmatpush1.bf16.msra.mxu0 %v397
    %400 = vmatprep.subr.bf16.mxu0 0
    %401 = vmatpush1.bf16.msra.mxu0 0
    %402 = vmatprep.subr.bf16.mxu0 0
    %403 = vmatpush1.bf16.msra.mxu0 0
    %404 = vmatprep.subr.bf16.mxu0 0
    %405 = vmatpush1.bf16.msra.mxu0 0
    %406 = vmatprep.subr.bf16.mxu0 0
    %407 = vmatpush1.bf16.msra.mxu0 0
    %408 = vmatprep.subr.bf16.mxu0 0
    %409 = vmatpush1.bf16.msra.mxu0 0
    %410 = vmatprep.subr.bf16.mxu0 0
    %411 = vmatpush1.bf16.msra.mxu0 0
    %412 = vmatprep.subr.bf16.mxu0 0
    %413 = vmatpush1.bf16.msra.mxu0 0
    %414 = vmatprep.subr.bf16.mxu0 0
    %415 = vmatpush1.bf16.msra.mxu0 0
    %416 = vmatprep.subr.bf16.mxu0 0
    %417 = vmatpush1.bf16.msra.mxu0 0
    %418 = vmatprep.subr.bf16.mxu0 0
    %419 = vmatpush1.bf16.msra.mxu0 0
    %420 = vmatprep.subr.bf16.mxu0 0
    %421 = vmatpush1.bf16.msra.mxu0 0
    %422 = vmatprep.subr.bf16.mxu0 0
    %423 = vmatpush1.bf16.msra.mxu0 0
    %424 = vmatprep.subr.bf16.mxu0 0
    %425 = vmatpush1.bf16.msra.mxu0 0
    %426 = vmatprep.subr.bf16.mxu0 0
    %427 = vmatpush1.bf16.msra.mxu0 0
    %428 = vmatprep.subr.bf16.mxu0 0
    %429 = vmatpush1.bf16.msra.mxu0 0
    %430 = vmatprep.mubr.bf16.mxu0 0
    %431 = vmatmul.mubr.bf16.gmra.mrb[0].mxu0 %v163
    %v432 = vpop.f32.mrb[0].mxu0
    %v433 = vadd.f32 0.0, %v432
    %v434 = vpop.f32.mrb[0].mxu0
    %v435 = vpop.f32.mrb[0].mxu0
    %v436 = vadd.f32 0.0, %v435
    %v437 = vpop.f32.mrb[0].mxu0
    %438 = vdwg.mxu0
    %439 = vmatprep.subr.bf16.mxu0 0
    %440 = vmatpush1.bf16.msra.mxu0 %v238
    %441 = vmatprep.subr.bf16.mxu0 0
    %442 = vmatpush1.bf16.msra.mxu0 %v239
    %443 = vmatprep.subr.bf16.mxu0 0
    %444 = vmatpush1.bf16.msra.mxu0 %v240
    %445 = vmatprep.subr.bf16.mxu0 0
    %446 = vmatpush1.bf16.msra.mxu0 %v241
    %447 = vmatprep.subr.bf16.mxu0 0
    %448 = vmatpush1.bf16.msra.mxu0 %v242
    %449 = vmatprep.subr.bf16.mxu0 0
    %450 = vmatpush1.bf16.msra.mxu0 %v243
    %451 = vmatprep.subr.bf16.mxu0 0
    %452 = vmatpush1.bf16.msra.mxu0 %v244
    %453 = vmatprep.subr.bf16.mxu0 0
    %454 = vmatpush1.bf16.msra.mxu0 %v245
    %455 = vmatprep.subr.bf16.mxu0 0
    %456 = vmatpush1.bf16.msra.mxu0 0
    %457 = vmatprep.subr.bf16.mxu0 0
    %458 = vmatpush1.bf16.msra.mxu0 0
    %459 = vmatprep.subr.bf16.mxu0 0
    %460 = vmatpush1.bf16.msra.mxu0 0
    %461 = vmatprep.subr.bf16.mxu0 0
    %462 = vmatpush1.bf16.msra.mxu0 0
    %463 = vmatprep.subr.bf16.mxu0 0
    %464 = vmatpush1.bf16.msra.mxu0 0
    %465 = vmatprep.subr.bf16.mxu0 0
    %466 = vmatpush1.bf16.msra.mxu0 0
    %467 = vmatprep.subr.bf16.mxu0 0
    %468 = vmatpush1.bf16.msra.mxu0 0
    %469 = vmatprep.subr.bf16.mxu0 0
    %470 = vmatpush1.bf16.msra.mxu0 0
    %471 = vmatprep.mubr.bf16.mxu0 0
    %472 = vmatmul.mubr.bf16.gmra.mrb[0].mxu0 %v397
    %v473 = vpop.f32.mrb[0].mxu0
    %v474 = vadd.f32 0.0, %v473
    %v475 = vpop.f32.mrb[0].mxu0
    %v476 = vpop.f32.mrb[0].mxu0
    %v477 = vadd.f32 0.0, %v476
    %v478 = vpop.f32.mrb[0].mxu0
    %479 = vdwg.mxu0
    %v480 = vpack.c.bf16 %v436, %v433
    %481 = vmatprep.subr.bf16.mxu0 0
    %482 = vmatpush1.bf16.msra.mxu0 %v328
    %483 = vmatprep.subr.bf16.mxu0 0
    %484 = vmatpush1.bf16.msra.mxu0 %v329
    %485 = vmatprep.subr.bf16.mxu0 0
    %486 = vmatpush1.bf16.msra.mxu0 %v330
    %487 = vmatprep.subr.bf16.mxu0 0
    %488 = vmatpush1.bf16.msra.mxu0 %v331
    %489 = vmatprep.subr.bf16.mxu0 0
    %490 = vmatpush1.bf16.msra.mxu0 %v332
    %491 = vmatprep.subr.bf16.mxu0 0
    %492 = vmatpush1.bf16.msra.mxu0 %v333
    %493 = vmatprep.subr.bf16.mxu0 0
    %494 = vmatpush1.bf16.msra.mxu0 %v334
    %495 = vmatprep.subr.bf16.mxu0 0
    %496 = vmatpush1.bf16.msra.mxu0 %v335
    %497 = vmatprep.subr.bf16.mxu0 0
    %498 = vmatpush1.bf16.msra.mxu0 0
    %499 = vmatprep.subr.bf16.mxu0 0
    %500 = vmatpush1.bf16.msra.mxu0 0
    %501 = vmatprep.subr.bf16.mxu0 0
    %502 = vmatpush1.bf16.msra.mxu0 0
    %503 = vmatprep.subr.bf16.mxu0 0
    %504 = vmatpush1.bf16.msra.mxu0 0
    %505 = vmatprep.subr.bf16.mxu0 0
    %506 = vmatpush1.bf16.msra.mxu0 0
    %507 = vmatprep.subr.bf16.mxu0 0
    %508 = vmatpush1.bf16.msra.mxu0 0
    %509 = vmatprep.subr.bf16.mxu0 0
    %510 = vmatpush1.bf16.msra.mxu0 0
    %511 = vmatprep.subr.bf16.mxu0 0
    %512 = vmatpush1.bf16.msra.mxu0 0
    %513 = vmatprep.mubr.bf16.mxu0 0
    %514 = vmatmul.mubr.bf16.gmra.mrb[0].mxu0 %v480
    %v515 = vpop.f32.mrb[0].mxu0
    %v516 = vadd.f32 0.0, %v515
    %v517 = vpop.f32.mrb[0].mxu0
    %v518 = vpop.f32.mrb[0].mxu0
    %v519 = vadd.f32 0.0, %v518
    %v520 = vpop.f32.mrb[0].mxu0
    %521 = vdwg.mxu0
    %v522 = vsub.f32 %v474, %v516
    %v523 = vsub.f32 %v477, %v519
    %v524 = vadd.f32 %v522, %v391
    %v525 = vadd.f32 %v523, %v391
    %v526 = vmax.f32 %v524, 0.0
    %v527 = vmax.f32 %v525, 0.0
    %v528 = vpack.c.bf16 %v527, %v526
    %529 = vmatprep.subr.bf16.mxu0 0
    %530 = vmatpush1.bf16.msra.mxu0 %v528
    %531 = vmatprep.subr.bf16.mxu0 0
    %532 = vmatpush1.bf16.msra.mxu0 0
    %533 = vmatprep.subr.bf16.mxu0 0
    %534 = vmatpush1.bf16.msra.mxu0 0
    %535 = vmatprep.subr.bf16.mxu0 0
    %536 = vmatpush1.bf16.msra.mxu0 0
    %537 = vmatprep.subr.bf16.mxu0 0
    %538 = vmatpush1.bf16.msra.mxu0 0
    %539 = vmatprep.subr.bf16.mxu0 0
    %540 = vmatpush1.bf16.msra.mxu0 0
    %541 = vmatprep.subr.bf16.mxu0 0
    %542 = vmatpush1.bf16.msra.mxu0 0
    %543 = vmatprep.subr.bf16.mxu0 0
    %544 = vmatpush1.bf16.msra.mxu0 0
    %545 = vmatprep.subr.bf16.mxu0 0
    %546 = vmatpush1.bf16.msra.mxu0 0
    %547 = vmatprep.subr.bf16.mxu0 0
    %548 = vmatpush1.bf16.msra.mxu0 0
    %549 = vmatprep.subr.bf16.mxu0 0
    %550 = vmatpush1.bf16.msra.mxu0 0
    %551 = vmatprep.subr.bf16.mxu0 0
    %552 = vmatpush1.bf16.msra.mxu0 0
    %553 = vmatprep.subr.bf16.mxu0 0
    %554 = vmatpush1.bf16.msra.mxu0 0
    %555 = vmatprep.subr.bf16.mxu0 0
    %556 = vmatpush1.bf16.msra.mxu0 0
    %557 = vmatprep.subr.bf16.mxu0 0
    %558 = vmatpush1.bf16.msra.mxu0 0
    %559 = vmatprep.subr.bf16.mxu0 0
    %560 = vmatpush1.bf16.msra.mxu0 0
    %561 = vmatprep.mubr.bf16.mxu0 0
    %562 = vmatmul.mubr.bf16.gmra.mrb[0].mxu0 %v163
    %v563 = vpop.f32.mrb[0].mxu0
    %v564 = vadd.f32 0.0, %v563
    %v565 = vpop.f32.mrb[0].mxu0
    %v566 = vpop.f32.mrb[0].mxu0
    %v567 = vadd.f32 0.0, %v566
    %v568 = vpop.f32.mrb[0].mxu0
    %569 = vdwg.mxu0
    %v586 = vunpack.c.l.b16 %v120
    %v587 = vunpack.c.l.b16 %v121
    %v588 = vunpack.c.l.b16 %v122
    %v589 = vunpack.c.l.b16 %v123
    %v590 = vunpack.c.l.b16 %v124
    %v591 = vunpack.c.l.b16 %v125
    %v592 = vunpack.c.l.b16 %v126
    %v593 = vunpack.c.l.b16 %v127
    %v594 = vunpack.c.l.b16 %v128
    %v595 = vunpack.c.l.b16 %v129
    %v596 = vunpack.c.l.b16 %v130
    %v597 = vunpack.c.l.b16 %v131
    %v598 = vunpack.c.l.b16 %v132
    %v599 = vunpack.c.l.b16 %v133
    %v600 = vunpack.c.l.b16 %v134
    %v601 = vunpack.c.l.b16 %v135
    %v602 = vpack.c.b16 %v587, %v586
    %v603 = vpack.c.b16 %v589, %v588
    %v604 = vpack.c.b16 %v591, %v590
    %v605 = vpack.c.b16 %v593, %v592
    %v606 = vpack.c.b16 %v595, %v594
    %v607 = vpack.c.b16 %v597, %v596
    %v608 = vpack.c.b16 %v599, %v598
    %v609 = vpack.c.b16 %v601, %v600
    %618 = vmatprep.subr.bf16.mxu0 0
    %619 = vmatpush1.bf16.msra.mxu0 %v602
    %620 = vmatprep.subr.bf16.mxu0 0
    %621 = vmatpush1.bf16.msra.mxu0 %v603
    %622 = vmatprep.subr.bf16.mxu0 0
    %623 = vmatpush1.bf16.msra.mxu0 %v604
    %624 = vmatprep.subr.bf16.mxu0 0
    %625 = vmatpush1.bf16.msra.mxu0 %v605
    %626 = vmatprep.subr.bf16.mxu0 0
    %627 = vmatpush1.bf16.msra.mxu0 %v606
    %628 = vmatprep.subr.bf16.mxu0 0
    %629 = vmatpush1.bf16.msra.mxu0 %v607
    %630 = vmatprep.subr.bf16.mxu0 0
    %631 = vmatpush1.bf16.msra.mxu0 %v608
    %632 = vmatprep.subr.bf16.mxu0 0
    %633 = vmatpush1.bf16.msra.mxu0 %v609
    %634 = vmatprep.subr.bf16.mxu0 0
    %635 = vmatpush1.bf16.msra.mxu0 0
    %636 = vmatprep.subr.bf16.mxu0 0
    %637 = vmatpush1.bf16.msra.mxu0 0
    %638 = vmatprep.subr.bf16.mxu0 0
    %639 = vmatpush1.bf16.msra.mxu0 0
    %640 = vmatprep.subr.bf16.mxu0 0
    %641 = vmatpush1.bf16.msra.mxu0 0
    %642 = vmatprep.subr.bf16.mxu0 0
    %643 = vmatpush1.bf16.msra.mxu0 0
    %644 = vmatprep.subr.bf16.mxu0 0
    %645 = vmatpush1.bf16.msra.mxu0 0
    %646 = vmatprep.subr.bf16.mxu0 0
    %647 = vmatpush1.bf16.msra.mxu0 0
    %648 = vmatprep.subr.bf16.mxu0 0
    %649 = vmatpush1.bf16.msra.mxu0 0
    %650 = vmatprep.mubr.bf16.mxu0 0
    %651 = vmatmul.mubr.bf16.gmra.mrb[0].mxu0 %v528
    %v652 = vpop.f32.mrb[0].mxu0
    %v653 = vadd.f32 0.0, %v652
    %v654 = vpop.f32.mrb[0].mxu0
    %v655 = vpop.f32.mrb[0].mxu0
    %v656 = vadd.f32 0.0, %v655
    %v657 = vpop.f32.mrb[0].mxu0
    %658 = vdwg.mxu0
    %v659 = vpack.c.bf16 %v567, %v564
    %v676 = vunpack.c.l.b16 %v136
    %v677 = vunpack.c.l.b16 %v137
    %v678 = vunpack.c.l.b16 %v138
    %v679 = vunpack.c.l.b16 %v139
    %v680 = vunpack.c.l.b16 %v140
    %v681 = vunpack.c.l.b16 %v141
    %v682 = vunpack.c.l.b16 %v142
    %v683 = vunpack.c.l.b16 %v143
    %v684 = vunpack.c.l.b16 %v144
    %v685 = vunpack.c.l.b16 %v145
    %v686 = vunpack.c.l.b16 %v146
    %v687 = vunpack.c.l.b16 %v147
    %v688 = vunpack.c.l.b16 %v148
    %v689 = vunpack.c.l.b16 %v149
    %v690 = vunpack.c.l.b16 %v150
    %v691 = vunpack.c.l.b16 %v151
    %v692 = vpack.c.b16 %v677, %v676
    %v693 = vpack.c.b16 %v679, %v678
    %v694 = vpack.c.b16 %v681, %v680
    %v695 = vpack.c.b16 %v683, %v682
    %v696 = vpack.c.b16 %v685, %v684
    %v697 = vpack.c.b16 %v687, %v686
    %v698 = vpack.c.b16 %v689, %v688
    %v699 = vpack.c.b16 %v691, %v690
    %708 = vmatprep.subr.bf16.mxu0 0
    %709 = vmatpush1.bf16.msra.mxu0 %v692
    %710 = vmatprep.subr.bf16.mxu0 0
    %711 = vmatpush1.bf16.msra.mxu0 %v693
    %712 = vmatprep.subr.bf16.mxu0 0
    %713 = vmatpush1.bf16.msra.mxu0 %v694
    %714 = vmatprep.subr.bf16.mxu0 0
    %715 = vmatpush1.bf16.msra.mxu0 %v695
    %716 = vmatprep.subr.bf16.mxu0 0
    %717 = vmatpush1.bf16.msra.mxu0 %v696
    %718 = vmatprep.subr.bf16.mxu0 0
    %719 = vmatpush1.bf16.msra.mxu0 %v697
    %720 = vmatprep.subr.bf16.mxu0 0
    %721 = vmatpush1.bf16.msra.mxu0 %v698
    %722 = vmatprep.subr.bf16.mxu0 0
    %723 = vmatpush1.bf16.msra.mxu0 %v699
    %724 = vmatprep.subr.bf16.mxu0 0
    %725 = vmatpush1.bf16.msra.mxu0 0
    %726 = vmatprep.subr.bf16.mxu0 0
    %727 = vmatpush1.bf16.msra.mxu0 0
    %728 = vmatprep.subr.bf16.mxu0 0
    %729 = vmatpush1.bf16.msra.mxu0 0
    %730 = vmatprep.subr.bf16.mxu0 0
    %731 = vmatpush1.bf16.msra.mxu0 0
    %732 = vmatprep.subr.bf16.mxu0 0
    %733 = vmatpush1.bf16.msra.mxu0 0
    %734 = vmatprep.subr.bf16.mxu0 0
    %735 = vmatpush1.bf16.msra.mxu0 0
    %736 = vmatprep.subr.bf16.mxu0 0
    %737 = vmatpush1.bf16.msra.mxu0 0
    %738 = vmatprep.subr.bf16.mxu0 0
    %739 = vmatpush1.bf16.msra.mxu0 0
    %740 = vmatprep.mubr.bf16.mxu0 0
    %741 = vmatmul.mubr.bf16.gmra.mrb[0].mxu0 %v659
    %v742 = vpop.f32.mrb[0].mxu0
    %v743 = vadd.f32 0.0, %v742
    %v744 = vpop.f32.mrb[0].mxu0
    %v745 = vpop.f32.mrb[0].mxu0
    %v746 = vadd.f32 0.0, %v745
    %v747 = vpop.f32.mrb[0].mxu0
    %748 = vdwg.mxu0
    %v749 = vsub.f32 %v653, %v743
    %v750 = vsub.f32 %v656, %v746
    %v752 = vlaneseq
    %v753 = vshrl.u32 %v752, 7
    %v754 = vsub.s32 0, %v753
    %v755 = vrot.slane %v152, %v754
    %v757 = vadd.f32 %v749, %v755
    %v758 = vadd.f32 %v750, %v755
    %759 = vst [vmem:[%s8] sm:$0xff] %v757
    %760 = vst [vmem:[%s8 + $0x8] sm:$0xff] %v758
    // Predicated region
    $region50: #{cheb_forward.1} parent=1 // pred_check
      _
    $region51: #{cheb_forward.1} parent=1 // pred_check_branch
      %762 = sbr.rel (0) target = $region53
    $region52: #{cheb_forward.1} parent=1 // pred_region
      _
    $region53: #{cheb_forward.1} parent=1 // pred_fallthru
      _
    // Predicated region
    $region54: #{cheb_forward.1} parent=1 // pred_check
      _
    $region55: #{cheb_forward.1} parent=1 // pred_check_branch
      %764 = sbr.rel (0) target = $region57
    $region56: #{cheb_forward.1} parent=1 // pred_region
      _
    $region57: #{cheb_forward.1} parent=1 // pred_fallthru
      _
    %765 = vsyncpa [#allocation3], 1
    %766 = vsyncpa [#allocation5], 1
    %767 = vsyncpa [#allocation8], 1

</llo_original>
